<compile_context>
chip_gen: v5e
topology: v5e:2x2
jax: 0.10.0
libtpu: 0.0.40
codegen_flags: <defaults>
</compile_context>

<pallas_src>
import jax
import jax.numpy as jnp
from jax.experimental import pallas as pl
from jax.experimental.pallas import tpu as pltpu

LANE = 128


def _round_up(n, m):
    return (n + m - 1) // m * m


def _pad_to(x, shape):
    pads = [(0, t - s) for s, t in zip(x.shape, shape)]
    return jnp.pad(x, pads)


def _default_vmem_limit():
    # ~100 MiB on the 128-MiB-VMEM parts (v5e / v6e), conservative 48 MiB on
    # v7x (64 MiB physical) and anything unrecognized.
    try:
        kind = jax.devices()[0].device_kind.lower()
    except Exception:
        kind = ""
    if "v5" in kind or "v6" in kind:
        return 100 * 1024 * 1024
    return 48 * 1024 * 1024


# ---- phase 1: support1 = X @ W1   (row-tiled over nodes, computed once) ----
def _support_kernel(x_ref, w_ref, out_ref):
    out_ref[...] = jnp.dot(
        x_ref[...], w_ref[...], preferred_element_type=jnp.float32
    ).astype(out_ref.dtype)


# ---- phase 2: support2 = relu(adj @ support1 + b1) @ W2   (rows x k grid) ----
def _layer1_kernel(adj_ref, s1_ref, b1_ref, w2_ref, out_ref, acc_ref):
    @pl.when(pl.program_id(1) == 0)
    def _():
        acc_ref[...] = jnp.zeros_like(acc_ref)

    acc_ref[...] += jnp.dot(adj_ref[...], s1_ref[...],
                            preferred_element_type=jnp.float32)

    @pl.when(pl.program_id(1) == pl.num_programs(1) - 1)
    def _():
        h1 = jnp.maximum(acc_ref[...] + b1_ref[...], 0.0)       # f32 elementwise
        out_ref[...] = jnp.dot(
            h1.astype(w2_ref.dtype), w2_ref[...],
            preferred_element_type=jnp.float32,
        ).astype(out_ref.dtype)


# ---- phase 3: out = log_softmax(adj @ support2 + b2)       (rows x k grid) ----
def _layer2_kernel(adj_ref, s2_ref, b2_ref, out_ref, acc_ref):
    @pl.when(pl.program_id(1) == 0)
    def _():
        acc_ref[...] = jnp.zeros_like(acc_ref)

    acc_ref[...] += jnp.dot(adj_ref[...], s2_ref[...],
                            preferred_element_type=jnp.float32)

    @pl.when(pl.program_id(1) == pl.num_programs(1) - 1)
    def _():
        # Padded class lanes carry -1e30 via the bias, so exp() underflows to 0
        # and the reduction only sees the real classes (no iota/where needed).
        h2 = acc_ref[...] + b2_ref[...]
        m = jnp.max(h2, axis=1, keepdims=True)
        z = h2 - m
        lse = jnp.log(jnp.sum(jnp.exp(z), axis=1, keepdims=True))
        out_ref[...] = z - lse


def gcn_forward(x, adj, w1, b1, w2, b2, *,
                matmul_dtype=jnp.bfloat16,
                row_block=256, k_block_cap=8192,
                vmem_limit_bytes=None):
    N, D = x.shape
    H = w1.shape[1]
    C = w2.shape[1]
    Hp = _round_up(H, LANE)            # hidden dim padded to lane width
    Cp = _round_up(C, LANE)            # class  dim padded to lane width

    if vmem_limit_bytes is None:
        vmem_limit_bytes = _default_vmem_limit()

    # ---- tile / padding selection (bounded VMEM, no divisibility assert) ----
    tm = _round_up(row_block, 16)          # row tile (bf16 sublane aligned)
    k_block_cap = _round_up(k_block_cap, tm)
    Np = _round_up(N, tm)
    if Np <= k_block_cap:
        tk = Np                            # single contraction step per row tile
    else:
        tk = k_block_cap                   # bound VMEM independently of N
        Np = _round_up(N, tk)              # tm | tk | Np
    grid1 = (Np // tm,)
    grid2 = (Np // tm, Np // tk)           # (rows, contraction); reduction last
    # Note: on v7x an even number of row tiles balances the two TensorCores;
    # for tiny graphs there is only one tile and nothing to shard.

    # ---- host-side padding + dtype casts (bf16 MXU operands, f32 biases) ----
    xp = _pad_to(x, (Np, D)).astype(matmul_dtype)
    adjp = _pad_to(adj, (Np, Np)).astype(matmul_dtype)
    w1p = _pad_to(w1, (D, Hp)).astype(matmul_dtype)
    w2p = _pad_to(w2, (Hp, Cp)).astype(matmul_dtype)
    b1p = _pad_to(jnp.reshape(b1, (1, -1)).astype(jnp.float32), (1, Hp))
    # Fold the class-padding mask into the bias: padded logits become -1e30.
    b2p = jnp.full((1, Cp), -1e30, dtype=jnp.float32)
    b2p = b2p.at[0, :C].set(b2.astype(jnp.float32))

    cparams1 = pltpu.CompilerParams(
        dimension_semantics=("parallel",),
        vmem_limit_bytes=vmem_limit_bytes,
    )
    cparams2 = pltpu.CompilerParams(
        dimension_semantics=("parallel", "arbitrary"),
        vmem_limit_bytes=vmem_limit_bytes,
    )

    # phase 1: support1 = X @ W1                                -> (Np, Hp)
    support1 = pl.pallas_call(
        _support_kernel,
        out_shape=jax.ShapeDtypeStruct((Np, Hp), matmul_dtype),
        grid=grid1,
        in_specs=[pl.BlockSpec((tm, D), lambda i: (i, 0)),
                  pl.BlockSpec((D, Hp), lambda i: (0, 0))],
        out_specs=pl.BlockSpec((tm, Hp), lambda i: (i, 0)),
        compiler_params=cparams1,
    )(xp, w1p)

    # phase 2: support2 = relu(adj @ support1 + b1) @ W2        -> (Np, Cp)
    support2 = pl.pallas_call(
        _layer1_kernel,
        out_shape=jax.ShapeDtypeStruct((Np, Cp), matmul_dtype),
        grid=grid2,
        in_specs=[pl.BlockSpec((tm, tk), lambda i, k: (i, k)),
                  pl.BlockSpec((tk, Hp), lambda i, k: (k, 0)),
                  pl.BlockSpec((1, Hp), lambda i, k: (0, 0)),
                  pl.BlockSpec((Hp, Cp), lambda i, k: (0, 0))],
        out_specs=pl.BlockSpec((tm, Cp), lambda i, k: (i, 0)),
        scratch_shapes=[pltpu.VMEM((tm, Hp), jnp.float32)],
        compiler_params=cparams2,
    )(adjp, support1, b1p, w2p)

    # phase 3: out = log_softmax(adj @ support2 + b2)           -> (Np, Cp)
    out_padded = pl.pallas_call(
        _layer2_kernel,
        out_shape=jax.ShapeDtypeStruct((Np, Cp), jnp.float32),
        grid=grid2,
        in_specs=[pl.BlockSpec((tm, tk), lambda i, k: (i, k)),
                  pl.BlockSpec((tk, Cp), lambda i, k: (k, 0)),
                  pl.BlockSpec((1, Cp), lambda i, k: (0, 0))],
        out_specs=pl.BlockSpec((tm, Cp), lambda i, k: (i, 0)),
        scratch_shapes=[pltpu.VMEM((tm, Cp), jnp.float32)],
        compiler_params=cparams2,
    )(adjp, support2, b2p)

    return out_padded[:N, :C]


def kaiming_uniform(key, fan_in, shape):
    # torch.nn.init.kaiming_uniform_ default: a=0, fan_in mode, leaky_relu gain
    bound = jnp.sqrt(6.0 / fan_in)
    return jax.random.uniform(key, shape, jnp.float32, -bound, bound)


if __name__ == "__main__":
    # Small synthetic shapes consistent with GCN(input_dim=D): N nodes, D in-features.
    N, D, H, C = 32, 64, 16, 7

    key = jax.random.PRNGKey(0)
    kx, kadj, kw1, kw2 = jax.random.split(key, 4)

    # Node features
    X = jax.random.normal(kx, (N, D), dtype=jnp.float32)

    # Dense symmetric-normalized adjacency with self loops (typical GCN preprocessing)
    a = (jax.random.uniform(kadj, (N, N)) > 0.8).astype(jnp.float32)
    a = jnp.maximum(a, a.T) + jnp.eye(N, dtype=jnp.float32)
    deg = jnp.sum(a, axis=1)
    d_inv_sqrt = 1.0 / jnp.sqrt(deg)
    adj = a * d_inv_sqrt[:, None] * d_inv_sqrt[None, :]

    # Deterministic parameter init (matches module __init__ shapes)
    W1 = kaiming_uniform(kw1, D, (D, H))
    b1 = jnp.zeros((H,), dtype=jnp.float32)
    W2 = kaiming_uniform(kw2, H, (H, C))
    b2 = jnp.zeros((C,), dtype=jnp.float32)

    def ref_forward(dtype):
        dot = lambda lhs, rhs: jnp.dot(lhs.astype(dtype), rhs.astype(dtype),
                                       preferred_element_type=jnp.float32)
        h1 = jnp.maximum(dot(adj, dot(X, W1)) + b1[None, :], 0.0)
        h2 = dot(adj, dot(h1.astype(dtype), W2)) + b2[None, :]
        return jax.nn.log_softmax(h2, axis=1)

    # f32 matmul path (tight check vs. plain-JAX reference)
    out = jax.block_until_ready(
        gcn_forward(X, adj, W1, b1, W2, b2, matmul_dtype=jnp.float32))
    ref = ref_forward(jnp.float32)
    assert out.shape == (N, C)
    assert jnp.allclose(out, ref, atol=1e-4, rtol=1e-4)

    # bf16 matmul path (default; recommended on v5e/v6e/v7x) vs. matching reference
    out_bf16 = jax.block_until_ready(
        gcn_forward(X, adj, W1, b1, W2, b2, matmul_dtype=jnp.bfloat16))
    ref_bf16 = ref_forward(jnp.bfloat16)
    assert out_bf16.shape == (N, C)
    assert jnp.allclose(out_bf16, ref_bf16, atol=2e-2, rtol=2e-2)

    print("KERNEL_OK")
</pallas_src>

<mosaic_0001>
module attributes {stable_mosaic.version = 11 : i64} {
  func.func @_support_kernel(%arg0: i32, %arg1: memref<256x64xf32, #tpu.memory_space<vmem>>, %arg2: memref<64x128xf32, #tpu.memory_space<vmem>>, %arg3: memref<256x128xf32, #tpu.memory_space<vmem>>) attributes {dimension_semantics = [#tpu.dimension_semantics<parallel>], iteration_bounds = array<i64: 1>, scalar_prefetch = 0 : i64, scratch_operands = 0 : i64, tpu.core_type = #tpu.core_type<tc>, window_params = [{transform_indices = @transform_0, window_bounds = array<i64: 256, 64>}, {pipeline_mode = #tpu.pipeline_mode<synchronous>, transform_indices = @transform_1, window_bounds = array<i64: 64, 128>}, {transform_indices = @transform_2, window_bounds = array<i64: 256, 128>}]} {
    %c0 = arith.constant 0 : index
    %c0_0 = arith.constant 0 : index
    %0 = vector.load %arg1[%c0, %c0_0] : memref<256x64xf32, #tpu.memory_space<vmem>>, vector<256x64xf32>
    %c0_1 = arith.constant 0 : index
    %c0_2 = arith.constant 0 : index
    %1 = vector.load %arg2[%c0_1, %c0_2] : memref<64x128xf32, #tpu.memory_space<vmem>>, vector<64x128xf32>
    %cst = arith.constant dense<0.000000e+00> : vector<256x128xf32>
    %2 = tpu.matmul %0, %1, %cst {dimension_numbers = #tpu.dot_dimension_numbers<[1], [0], [0], [1], [0, 0, 1, 1], [], []>} : vector<256x64xf32>, vector<64x128xf32>, vector<256x128xf32> -> vector<256x128xf32>
    %c0_3 = arith.constant 0 : index
    %c0_4 = arith.constant 0 : index
    %3 = vector.load %arg3[%c0_3, %c0_4] : memref<256x128xf32, #tpu.memory_space<vmem>>, vector<256x128xf32>
    tpu.vector_store %arg3[%c0_3, %c0_4], %2 {strides = array<i32>} : memref<256x128xf32, #tpu.memory_space<vmem>>, vector<256x128xf32>,
    return
  }
  func.func @transform_0(%arg0: i32) -> (i32, i32) {
    %c0_i32 = arith.constant 0 : i32
    %c0_i32_0 = arith.constant 0 : i32
    return %arg0, %c0_i32 : i32, i32
  }
  func.func @transform_1(%arg0: i32) -> (i32, i32) {
    %c0_i32 = arith.constant 0 : i32
    %c0_i32_0 = arith.constant 0 : i32
    %c0_i32_1 = arith.constant 0 : i32
    return %c0_i32, %c0_i32_0 : i32, i32
  }
  func.func @transform_2(%arg0: i32) -> (i32, i32) {
    %c0_i32 = arith.constant 0 : i32
    %c0_i32_0 = arith.constant 0 : i32
    return %arg0, %c0_i32 : i32, i32
  }
}

</mosaic_0001>

<llo_original>
// kernel: tpu_custom_call.1
$region0: #{tpu_custom_call.1}
  #allocation0 [shape = 'u32[]', space=smem, size = 0x4, offset = 0x4, fixed_abs, tag = 'smem constant byte address 0x4 - core index']
  #allocation1 [shape = 'u32[72,128]{1,0:T(1,128)}', space=vmem, size = 0x9000, scoped, tag = 'internal scratch']
  %s0 = inlined_call_operand.vmem [shape: f32[256,64], index: 0, kind: input, shape index: {}]
  %s1 = inlined_call_operand.vmem [shape: f32[64,128], index: 1, kind: input, shape index: {}]
  %s2 = inlined_call_operand.hbm [shape: f32[256,128], index: 2, kind: output, shape index: {}]
  %s3 = sld [smem:[#allocation0]]
  $region18: #{tpu_custom_call.1} parent=0
    _
  %s5 = ssub.s32 1, %s3
  %s6 = scalar_select 0, %s5, %s3
  $region1: #{tpu_custom_call.1} parent=0
    #allocation2 [shape = 'u8[131072]{0}', space=vmem, size = 0x20000, scoped, tag = 'output window, operand 0, single buffered']
    #allocation3 [shape = 's32[1]{0}', space=sflag, size = 0x4, scoped, tag = 'scoped memory for tpu_custom_call.1']
    %7 = vsyncpa [#allocation3], 0
    // Predicated region
    $region2: #{tpu_custom_call.1} parent=1 // pred_check
      _
    $region3: #{tpu_custom_call.1} parent=1 // pred_check_branch
      %9 = sbr.rel (0) target = $region5
    $region4: #{tpu_custom_call.1} parent=1 // pred_region
      _
    $region5: #{tpu_custom_call.1} parent=1 // pred_fallthru
      _
    // Predicated region
    $region6: #{tpu_custom_call.1} parent=1 // pred_check
      _
    $region7: #{tpu_custom_call.1} parent=1 // pred_check_branch
      %11 = sbr.rel (0) target = $region9
    $region8: #{tpu_custom_call.1} parent=1 // pred_region
      _
    $region9: #{tpu_custom_call.1} parent=1 // pred_fallthru
      _
    %v12 = vld [vmem:[%s0] sm:$0xff]
    %v13 = vld [vmem:[%s0 + $0x8] sm:$0xff]
    %v14 = vld [vmem:[%s0 + $0x10] sm:$0xff]
    %v15 = vld [vmem:[%s0 + $0x18] sm:$0xff]
    %v16 = vld [vmem:[%s0 + $0x20] sm:$0xff]
    %v17 = vld [vmem:[%s0 + $0x28] sm:$0xff]
    %v18 = vld [vmem:[%s0 + $0x30] sm:$0xff]
    %v19 = vld [vmem:[%s0 + $0x38] sm:$0xff]
    %v20 = vld [vmem:[%s0 + $0x40] sm:$0xff]
    %v21 = vld [vmem:[%s0 + $0x48] sm:$0xff]
    %v22 = vld [vmem:[%s0 + $0x50] sm:$0xff]
    %v23 = vld [vmem:[%s0 + $0x58] sm:$0xff]
    %v24 = vld [vmem:[%s0 + $0x60] sm:$0xff]
    %v25 = vld [vmem:[%s0 + $0x68] sm:$0xff]
    %v26 = vld [vmem:[%s0 + $0x70] sm:$0xff]
    %v27 = vld [vmem:[%s0 + $0x78] sm:$0xff]
    %v28 = vld [vmem:[%s0 + $0x80] sm:$0xff]
    %v29 = vld [vmem:[%s0 + $0x88] sm:$0xff]
    %v30 = vld [vmem:[%s0 + $0x90] sm:$0xff]
    %v31 = vld [vmem:[%s0 + $0x98] sm:$0xff]
    %v32 = vld [vmem:[%s0 + $0xa0] sm:$0xff]
    %v33 = vld [vmem:[%s0 + $0xa8] sm:$0xff]
    %v34 = vld [vmem:[%s0 + $0xb0] sm:$0xff]
    %v35 = vld [vmem:[%s0 + $0xb8] sm:$0xff]
    %v36 = vld [vmem:[%s0 + $0xc0] sm:$0xff]
    %v37 = vld [vmem:[%s0 + $0xc8] sm:$0xff]
    %v38 = vld [vmem:[%s0 + $0xd0] sm:$0xff]
    %v39 = vld [vmem:[%s0 + $0xd8] sm:$0xff]
    %v40 = vld [vmem:[%s0 + $0xe0] sm:$0xff]
    %v41 = vld [vmem:[%s0 + $0xe8] sm:$0xff]
    %v42 = vld [vmem:[%s0 + $0xf0] sm:$0xff]
    %v43 = vld [vmem:[%s0 + $0xf8] sm:$0xff]
    %v44 = vld [vmem:[%s1] sm:$0xff]
    %v45 = vld [vmem:[%s1 + $0x8] sm:$0xff]
    %v46 = vld [vmem:[%s1 + $0x10] sm:$0xff]
    %v47 = vld [vmem:[%s1 + $0x18] sm:$0xff]
    %v48 = vld [vmem:[%s1 + $0x20] sm:$0xff]
    %v49 = vld [vmem:[%s1 + $0x28] sm:$0xff]
    %v50 = vld [vmem:[%s1 + $0x30] sm:$0xff]
    %v51 = vld [vmem:[%s1 + $0x38] sm:$0xff]
    %vm52 = vcmask 523264
    %v54 = vsel %vm52, %v12, 0
    %v57 = vsel %vm52, %v13, 0
    %v60 = vsel %vm52, %v14, 0
    %v63 = vsel %vm52, %v15, 0
    %v66 = vsel %vm52, %v16, 0
    %v69 = vsel %vm52, %v17, 0
    %v72 = vsel %vm52, %v18, 0
    %v75 = vsel %vm52, %v19, 0
    %v78 = vsel %vm52, %v20, 0
    %v81 = vsel %vm52, %v21, 0
    %v84 = vsel %vm52, %v22, 0
    %v87 = vsel %vm52, %v23, 0
    %v90 = vsel %vm52, %v24, 0
    %v93 = vsel %vm52, %v25, 0
    %v96 = vsel %vm52, %v26, 0
    %v99 = vsel %vm52, %v27, 0
    %v102 = vsel %vm52, %v28, 0
    %v105 = vsel %vm52, %v29, 0
    %v108 = vsel %vm52, %v30, 0
    %v111 = vsel %vm52, %v31, 0
    %v114 = vsel %vm52, %v32, 0
    %v117 = vsel %vm52, %v33, 0
    %v120 = vsel %vm52, %v34, 0
    %v123 = vsel %vm52, %v35, 0
    %v126 = vsel %vm52, %v36, 0
    %v129 = vsel %vm52, %v37, 0
    %v132 = vsel %vm52, %v38, 0
    %v135 = vsel %vm52, %v39, 0
    %v138 = vsel %vm52, %v40, 0
    %v141 = vsel %vm52, %v41, 0
    %v144 = vsel %vm52, %v42, 0
    %v147 = vsel %vm52, %v43, 0
    %149 = vmatpush.msra.mxu0 0.0
    %150 = vmatpush.msra.mxu0 0.0
    %151 = vmatpush.msra.mxu0 0.0
    %152 = vmatpush.msra.mxu0 0.0
    %153 = vmatpush.msra.mxu0 0.0
    %154 = vmatpush.msra.mxu0 0.0
    %155 = vmatpush.msra.mxu0 0.0
    %156 = vmatpush.msra.mxu0 0.0
    %157 = vmatpush.msra.mxu0 %v51
    %158 = vmatpush.msra.mxu0 %v50
    %159 = vmatpush.msra.mxu0 %v49
    %160 = vmatpush.msra.mxu0 %v48
    %161 = vmatpush.msra.mxu0 %v47
    %162 = vmatpush.msra.mxu0 %v46
    %163 = vmatpush.msra.mxu0 %v45
    %164 = vmatpush.msra.mxu0 %v44
    %165 = vmatmul.f32.gmra.mxu0 %v54
    %v166 = vpop.f32.mrf.mxu0
    %v167 = vadd.f32 0.0, %v166
    %168 = vmatmul.f32.gmra.mxu0 %v57
    %v169 = vpop.f32.mrf.mxu0
    %v170 = vadd.f32 0.0, %v169
    %171 = vmatmul.f32.gmra.mxu0 %v60
    %v172 = vpop.f32.mrf.mxu0
    %v173 = vadd.f32 0.0, %v172
    %174 = vmatmul.f32.gmra.mxu0 %v63
    %v175 = vpop.f32.mrf.mxu0
    %v176 = vadd.f32 0.0, %v175
    %177 = vmatmul.f32.gmra.mxu0 %v66
    %v178 = vpop.f32.mrf.mxu0
    %v179 = vadd.f32 0.0, %v178
    %180 = vmatmul.f32.gmra.mxu0 %v69
    %v181 = vpop.f32.mrf.mxu0
    %v182 = vadd.f32 0.0, %v181
    %183 = vmatmul.f32.gmra.mxu0 %v72
    %v184 = vpop.f32.mrf.mxu0
    %v185 = vadd.f32 0.0, %v184
    %186 = vmatmul.f32.gmra.mxu0 %v75
    %v187 = vpop.f32.mrf.mxu0
    %v188 = vadd.f32 0.0, %v187
    %189 = vmatmul.f32.gmra.mxu0 %v78
    %v190 = vpop.f32.mrf.mxu0
    %v191 = vadd.f32 0.0, %v190
    %192 = vmatmul.f32.gmra.mxu0 %v81
    %v193 = vpop.f32.mrf.mxu0
    %v194 = vadd.f32 0.0, %v193
    %195 = vmatmul.f32.gmra.mxu0 %v84
    %v196 = vpop.f32.mrf.mxu0
    %v197 = vadd.f32 0.0, %v196
    %198 = vmatmul.f32.gmra.mxu0 %v87
    %v199 = vpop.f32.mrf.mxu0
    %v200 = vadd.f32 0.0, %v199
    %201 = vmatmul.f32.gmra.mxu0 %v90
    %v202 = vpop.f32.mrf.mxu0
    %v203 = vadd.f32 0.0, %v202
    %204 = vmatmul.f32.gmra.mxu0 %v93
    %v205 = vpop.f32.mrf.mxu0
    %v206 = vadd.f32 0.0, %v205
    %207 = vmatmul.f32.gmra.mxu0 %v96
    %v208 = vpop.f32.mrf.mxu0
    %v209 = vadd.f32 0.0, %v208
    %210 = vmatmul.f32.gmra.mxu0 %v99
    %v211 = vpop.f32.mrf.mxu0
    %v212 = vadd.f32 0.0, %v211
    %213 = vmatmul.f32.gmra.mxu0 %v102
    %v214 = vpop.f32.mrf.mxu0
    %v215 = vadd.f32 0.0, %v214
    %216 = vmatmul.f32.gmra.mxu0 %v105
    %v217 = vpop.f32.mrf.mxu0
    %v218 = vadd.f32 0.0, %v217
    %219 = vmatmul.f32.gmra.mxu0 %v108
    %v220 = vpop.f32.mrf.mxu0
    %v221 = vadd.f32 0.0, %v220
    %222 = vmatmul.f32.gmra.mxu0 %v111
    %v223 = vpop.f32.mrf.mxu0
    %v224 = vadd.f32 0.0, %v223
    %225 = vmatmul.f32.gmra.mxu0 %v114
    %v226 = vpop.f32.mrf.mxu0
    %v227 = vadd.f32 0.0, %v226
    %228 = vmatmul.f32.gmra.mxu0 %v117
    %v229 = vpop.f32.mrf.mxu0
    %v230 = vadd.f32 0.0, %v229
    %231 = vmatmul.f32.gmra.mxu0 %v120
    %v232 = vpop.f32.mrf.mxu0
    %v233 = vadd.f32 0.0, %v232
    %234 = vmatmul.f32.gmra.mxu0 %v123
    %v235 = vpop.f32.mrf.mxu0
    %v236 = vadd.f32 0.0, %v235
    %237 = vmatmul.f32.gmra.mxu0 %v126
    %v238 = vpop.f32.mrf.mxu0
    %v239 = vadd.f32 0.0, %v238
    %240 = vmatmul.f32.gmra.mxu0 %v129
    %v241 = vpop.f32.mrf.mxu0
    %v242 = vadd.f32 0.0, %v241
    %243 = vmatmul.f32.gmra.mxu0 %v132
    %v244 = vpop.f32.mrf.mxu0
    %v245 = vadd.f32 0.0, %v244
    %246 = vmatmul.f32.gmra.mxu0 %v135
    %v247 = vpop.f32.mrf.mxu0
    %v248 = vadd.f32 0.0, %v247
    %249 = vmatmul.f32.gmra.mxu0 %v138
    %v250 = vpop.f32.mrf.mxu0
    %v251 = vadd.f32 0.0, %v250
    %252 = vmatmul.f32.gmra.mxu0 %v141
    %v253 = vpop.f32.mrf.mxu0
    %v254 = vadd.f32 0.0, %v253
    %255 = vmatmul.f32.gmra.mxu0 %v144
    %v256 = vpop.f32.mrf.mxu0
    %v257 = vadd.f32 0.0, %v256
    %258 = vmatmul.f32.gmra.mxu0 %v147
    %v259 = vpop.f32.mrf.mxu0
    %v260 = vadd.f32 0.0, %v259
    %261 = vdwg.mxu0
    %262 = vst [vmem:[#allocation2] sm:$0xff] %v167
    %263 = vst [vmem:[#allocation2 + $0x8] sm:$0xff] %v170
    %264 = vst [vmem:[#allocation2 + $0x10] sm:$0xff] %v173
    %265 = vst [vmem:[#allocation2 + $0x18] sm:$0xff] %v176
    %266 = vst [vmem:[#allocation2 + $0x20] sm:$0xff] %v179
    %267 = vst [vmem:[#allocation2 + $0x28] sm:$0xff] %v182
    %268 = vst [vmem:[#allocation2 + $0x30] sm:$0xff] %v185
    %269 = vst [vmem:[#allocation2 + $0x38] sm:$0xff] %v188
    %270 = vst [vmem:[#allocation2 + $0x40] sm:$0xff] %v191
    %271 = vst [vmem:[#allocation2 + $0x48] sm:$0xff] %v194
    %272 = vst [vmem:[#allocation2 + $0x50] sm:$0xff] %v197
    %273 = vst [vmem:[#allocation2 + $0x58] sm:$0xff] %v200
    %274 = vst [vmem:[#allocation2 + $0x60] sm:$0xff] %v203
    %275 = vst [vmem:[#allocation2 + $0x68] sm:$0xff] %v206
    %276 = vst [vmem:[#allocation2 + $0x70] sm:$0xff] %v209
    %277 = vst [vmem:[#allocation2 + $0x78] sm:$0xff] %v212
    %278 = vst [vmem:[#allocation2 + $0x80] sm:$0xff] %v215
    %279 = vst [vmem:[#allocation2 + $0x88] sm:$0xff] %v218
    %280 = vst [vmem:[#allocation2 + $0x90] sm:$0xff] %v221
    %281 = vst [vmem:[#allocation2 + $0x98] sm:$0xff] %v224
    %282 = vst [vmem:[#allocation2 + $0xa0] sm:$0xff] %v227
    %283 = vst [vmem:[#allocation2 + $0xa8] sm:$0xff] %v230
    %284 = vst [vmem:[#allocation2 + $0xb0] sm:$0xff] %v233
    %285 = vst [vmem:[#allocation2 + $0xb8] sm:$0xff] %v236
    %286 = vst [vmem:[#allocation2 + $0xc0] sm:$0xff] %v239
    %287 = vst [vmem:[#allocation2 + $0xc8] sm:$0xff] %v242
    %288 = vst [vmem:[#allocation2 + $0xd0] sm:$0xff] %v245
    %289 = vst [vmem:[#allocation2 + $0xd8] sm:$0xff] %v248
    %290 = vst [vmem:[#allocation2 + $0xe0] sm:$0xff] %v251
    %291 = vst [vmem:[#allocation2 + $0xe8] sm:$0xff] %v254
    %292 = vst [vmem:[#allocation2 + $0xf0] sm:$0xff] %v257
    %293 = vst [vmem:[#allocation2 + $0xf8] sm:$0xff] %v260
    // Predicated region
    $region10: #{tpu_custom_call.1} parent=1 // pred_check
      _
    $region11: #{tpu_custom_call.1} parent=1 // pred_check_branch
      %295 = sbr.rel (0) target = $region13
    $region12: #{tpu_custom_call.1} parent=1 // pred_region
      %297 = vsyncadd [#allocation3], 0
      %s298 = sshll.u32 [#allocation2], 4
      %s299 = int_to_ptr.vmem [resolvable:$true] %s298
      %s300 = sshll.u32 %s2, 4
      %s301 = int_to_ptr.hbm [resolvable:$true] %s300
      %306 = dma.vmem_to_hbm [thread:$0]  %s299, 4096, %s301, [#allocation3], 128, 128, 8
    $region13: #{tpu_custom_call.1} parent=1 // pred_fallthru
      _
    // Predicated region
    $region14: #{tpu_custom_call.1} parent=1 // pred_check
      _
    $region15: #{tpu_custom_call.1} parent=1 // pred_check_branch
      %308 = sbr.rel (0) target = $region17
    $region16: #{tpu_custom_call.1} parent=1 // pred_region
      %310 = dma.done [#allocation3], 4096
    $region17: #{tpu_custom_call.1} parent=1 // pred_fallthru
      _
    %311 = vsyncpa [#allocation3], 1

</llo_original>
